<compile_context>
chip_gen: v6e
topology: v6e:2x2x1
jax: 0.10.0
libtpu: 0.0.40
codegen_flags: <defaults>
</compile_context>

<pallas_src>
import functools
import math

import jax
import jax.numpy as jnp
from jax.experimental import pallas as pl
from jax.experimental.pallas import tpu as pltpu

_SUBLANE = 8                        # second-minor alignment for f32
_VMEM_SOFT_TARGET = 48 * 2**20      # keep resident footprint under this (v7x: 64 MiB physical)
_VMEM_DEFAULT_SCOPED = 30 * 2**20   # only raise vmem_limit_bytes above the ~32 MiB default


def _round_up(x: int, m: int) -> int:
    return (x + m - 1) // m * m


def _fused_mlp_kernel(*refs, num_layers: int, compute_dtype):
    """refs = (x, w0, b0, w1, b1, ..., w_{L-1}, b_{L-1}, out).

    Straight-line chain of MXU matmuls; intermediates never touch HBM.
    Accumulation is always f32; operands are cast to `compute_dtype`
    (f32 or bf16, matching the prepared weights).
    """
    x_ref, o_ref = refs[0], refs[-1]
    wb = refs[1:-1]

    h = x_ref[...].astype(jnp.float32)
    for i in range(num_layers):
        w = wb[2 * i][...]
        b = wb[2 * i + 1][...]                       # (1, Dout) -> broadcast over rows
        h = jnp.dot(h.astype(compute_dtype), w,
                    preferred_element_type=jnp.float32)
        h = h + b.astype(jnp.float32)
        if i != num_layers - 1:
            h = jnp.maximum(h, 0.0)                  # ReLU on all hidden layers
    o_ref[...] = h.astype(o_ref.dtype)


def prepare_params(params, *, use_bf16: bool = False):
    """One-time parameter prep (hoisted out of the forward path).

    Reshapes biases to (1, Dout) and optionally casts weights to bf16 for the
    MXU (accumulation stays f32).  Biases are kept in f32.
    """
    prepped = []
    for w, b in params:
        w = jnp.asarray(w)
        if use_bf16:
            w = w.astype(jnp.bfloat16)
        prepped.append((w, jnp.asarray(b, jnp.float32).reshape(1, -1)))
    return prepped


def _vmem_estimate(tb, dims, wb_bytes, x_itemsize):
    # Weights/biases (budget 2x for pipelining buffers), double-buffered
    # x/out tiles, plus one f32 intermediate slab at the widest layer.
    io = 2 * tb * (dims[0] + dims[-1]) * x_itemsize
    inter = tb * max(dims) * 4
    return 2 * wb_bytes + io + inter


def mlp_forward(x, params, *, batch_tile: int = 1024, small_batch_rows: int = 256):
    """Fused MLP forward.

    x: (B, Din).  params: output of prepare_params() — list of
    (W:(Din_i, Dout_i), b:(1, Dout_i)).
    """
    B, Din = x.shape
    L = len(params)
    dims = [Din] + [w.shape[1] for w, _ in params]
    Dout = dims[-1]
    compute_dtype = params[0][0].dtype

    wb_ops = []
    for w, b in params:
        wb_ops += [w, b]
    wb_bytes = sum(int(a.size) * a.dtype.itemsize for a in wb_ops)
    x_itemsize = x.dtype.itemsize

    kernel = functools.partial(
        _fused_mlp_kernel, num_layers=L, compute_dtype=compute_dtype)

    b8 = _round_up(B, _SUBLANE)

    # ---- small batch: single fused VMEM block, no grid ---------------------
    if (b8 <= small_batch_rows
            and _vmem_estimate(b8, dims, wb_bytes, x_itemsize) <= _VMEM_DEFAULT_SCOPED):
        return pl.pallas_call(
            kernel,
            out_shape=jax.ShapeDtypeStruct((B, Dout), x.dtype),
            in_specs=[pl.BlockSpec(memory_space=pltpu.MemorySpace.VMEM)] * (1 + 2 * L),
            out_specs=pl.BlockSpec(memory_space=pltpu.MemorySpace.VMEM),
        )(x, *wb_ops)

    # ---- large batch: tile the batch axis; weights stay VMEM-resident ------
    # At least 2 tiles so the "parallel" axis can shard across v7x's two TCs.
    nb = max(2, pl.cdiv(b8, batch_tile))
    tb = _round_up(pl.cdiv(b8, nb), _SUBLANE)      # balanced tiles, waste < 8 rows each

    # Shrink the batch tile until the resident footprint fits the VMEM target
    # (matters on v7x: 64 MiB physical / 32 MiB default scoped VMEM).
    while tb > _SUBLANE and _vmem_estimate(tb, dims, wb_bytes, x_itemsize) > _VMEM_SOFT_TARGET:
        tb = _round_up(tb // 2, _SUBLANE)
    # TODO(synk): if the weights alone exceed the VMEM target (huge hidden dims),
    # add a K/N-tiled accumulator variant instead of keeping all layers resident.

    nb = pl.cdiv(b8, tb)
    b_pad = nb * tb
    x_in = x if b_pad == B else jnp.pad(x, ((0, b_pad - B), (0, 0)))

    in_specs = [pl.BlockSpec((tb, Din), lambda i: (i, 0))]
    for li in range(L):
        din, dout = dims[li], dims[li + 1]
        in_specs.append(pl.BlockSpec((din, dout), lambda i: (0, 0)))   # resident weight
        in_specs.append(pl.BlockSpec((1, dout), lambda i: (0, 0)))     # resident bias

    est = _vmem_estimate(tb, dims, wb_bytes, x_itemsize)
    vmem_limit = None
    if est > _VMEM_DEFAULT_SCOPED:
        vmem_limit = int(min(est + est // 2, 64 * 2**20))

    out = pl.pallas_call(
        kernel,
        out_shape=jax.ShapeDtypeStruct((b_pad, Dout), x.dtype),
        grid=(nb,),
        in_specs=in_specs,
        out_specs=pl.BlockSpec((tb, Dout), lambda i: (i, 0)),
        compiler_params=pltpu.CompilerParams(
            dimension_semantics=("parallel",),   # shard batch tiles across TCs (v7x)
            vmem_limit_bytes=vmem_limit,
        ),
    )(x_in, *wb_ops)
    return out if b_pad == B else out[:B]


def init_mlp_params(key, input_dim, embed_dim, hidden_channels):
    """Deterministic init mirroring nn.Linear (kaiming-uniform weight, uniform bias)."""
    dims = [input_dim] + list(hidden_channels) + [embed_dim]
    params = []
    for i in range(len(dims) - 1):
        in_dim, out_dim = dims[i], dims[i + 1]
        key, kw, kb = jax.random.split(key, 3)
        bound = 1.0 / math.sqrt(in_dim)
        w = jax.random.uniform(kw, (in_dim, out_dim), jnp.float32, -bound, bound)
        bias = jax.random.uniform(kb, (out_dim,), jnp.float32, -bound, bound)
        params.append((w, bias))
    return params


def _reference(x, params):
    h = x
    for i, (w, b) in enumerate(params):
        h = h @ w + b
        if i != len(params) - 1:
            h = jnp.maximum(h, 0.0)
    return h


if __name__ == "__main__":
    # Module defaults: input_dim=64, embed_dim=6, hidden_channels=[32, 32].
    input_dim = 64
    embed_dim = 6
    hidden_channels = [32, 32]
    batch = 8

    key = jax.random.PRNGKey(0)
    key, kx = jax.random.split(key)
    x = jax.random.normal(kx, (batch, input_dim), dtype=jnp.float32)
    params = init_mlp_params(key, input_dim, embed_dim, hidden_channels)
    params_f32 = prepare_params(params)           # one-time prep, outside the forward path

    fwd = jax.jit(mlp_forward)

    # Small-batch path (single fused VMEM block, no grid, no padding/slicing).
    out = jax.block_until_ready(fwd(x, params_f32))
    ref = _reference(x, params)
    assert out.shape == (batch, embed_dim)
    assert jnp.allclose(out, ref, atol=1e-5, rtol=1e-5)

    # Batch-tiled path: nb >= 2 balanced tiles, minimal batch padding (600 -> 608).
    key, kx2 = jax.random.split(key)
    x_big = jax.random.normal(kx2, (600, input_dim), dtype=jnp.float32)
    out_big = jax.block_until_ready(fwd(x_big, params_f32))
    ref_big = _reference(x_big, params)
    assert out_big.shape == (600, embed_dim)
    assert jnp.allclose(out_big, ref_big, atol=1e-5, rtol=1e-5)

    # Optional bf16 MXU operands (f32 accumulation) — looser tolerance.
    params_bf16 = prepare_params(params, use_bf16=True)
    out_bf16 = jax.block_until_ready(fwd(x_big, params_bf16))
    assert out_bf16.shape == (600, embed_dim)
    assert jnp.allclose(out_bf16, ref_big, atol=5e-2, rtol=5e-2)

    print("KERNEL_OK")
</pallas_src>

<mosaic_0001>
module attributes {stable_mosaic.version = 11 : i64} {
  func.func @_fused_mlp_kernel(%arg0: memref<8x64xf32, #tpu.memory_space<vmem>>, %arg1: memref<64x32xf32, #tpu.memory_space<vmem>>, %arg2: memref<1x32xf32, #tpu.memory_space<vmem>>, %arg3: memref<32x32xf32, #tpu.memory_space<vmem>>, %arg4: memref<1x32xf32, #tpu.memory_space<vmem>>, %arg5: memref<32x6xf32, #tpu.memory_space<vmem>>, %arg6: memref<1x6xf32, #tpu.memory_space<vmem>>, %arg7: memref<8x6xf32, #tpu.memory_space<vmem>>) attributes {dimension_semantics = [], scalar_prefetch = 0 : i64, scratch_operands = 0 : i64, tpu.core_type = #tpu.core_type<tc>} {
    %c0 = arith.constant 0 : index
    %c0_0 = arith.constant 0 : index
    %0 = vector.load %arg0[%c0, %c0_0] : memref<8x64xf32, #tpu.memory_space<vmem>>, vector<8x64xf32>
    %c0_1 = arith.constant 0 : index
    %c0_2 = arith.constant 0 : index
    %1 = vector.load %arg1[%c0_1, %c0_2] : memref<64x32xf32, #tpu.memory_space<vmem>>, vector<64x32xf32>
    %c0_3 = arith.constant 0 : index
    %c0_4 = arith.constant 0 : index
    %2 = vector.load %arg2[%c0_3, %c0_4] : memref<1x32xf32, #tpu.memory_space<vmem>>, vector<1x32xf32>
    %cst = arith.constant dense<0.000000e+00> : vector<8x32xf32>
    %3 = tpu.matmul %0, %1, %cst {dimension_numbers = #tpu.dot_dimension_numbers<[1], [0], [0], [1], [0, 0, 1, 1], [], []>} : vector<8x64xf32>, vector<64x32xf32>, vector<8x32xf32> -> vector<8x32xf32>
    %4 = vector.broadcast %2 : vector<1x32xf32> to vector<8x32xf32>
    %5 = arith.addf %3, %4 : vector<8x32xf32>
    %cst_5 = arith.constant 0.000000e+00 : f32
    %6 = vector.broadcast %cst_5 : f32 to vector<8x32xf32>
    %7 = arith.maximumf %5, %6 : vector<8x32xf32>
    %c0_6 = arith.constant 0 : index
    %c0_7 = arith.constant 0 : index
    %8 = vector.load %arg3[%c0_6, %c0_7] : memref<32x32xf32, #tpu.memory_space<vmem>>, vector<32x32xf32>
    %c0_8 = arith.constant 0 : index
    %c0_9 = arith.constant 0 : index
    %9 = vector.load %arg4[%c0_8, %c0_9] : memref<1x32xf32, #tpu.memory_space<vmem>>, vector<1x32xf32>
    %cst_10 = arith.constant dense<0.000000e+00> : vector<8x32xf32>
    %10 = tpu.matmul %7, %8, %cst_10 {dimension_numbers = #tpu.dot_dimension_numbers<[1], [0], [0], [1], [0, 0, 1, 1], [], []>} : vector<8x32xf32>, vector<32x32xf32>, vector<8x32xf32> -> vector<8x32xf32>
    %11 = vector.broadcast %9 : vector<1x32xf32> to vector<8x32xf32>
    %12 = arith.addf %10, %11 : vector<8x32xf32>
    %cst_11 = arith.constant 0.000000e+00 : f32
    %13 = vector.broadcast %cst_11 : f32 to vector<8x32xf32>
    %14 = arith.maximumf %12, %13 : vector<8x32xf32>
    %c0_12 = arith.constant 0 : index
    %c0_13 = arith.constant 0 : index
    %15 = vector.load %arg5[%c0_12, %c0_13] : memref<32x6xf32, #tpu.memory_space<vmem>>, vector<32x6xf32>
    %c0_14 = arith.constant 0 : index
    %c0_15 = arith.constant 0 : index
    %16 = vector.load %arg6[%c0_14, %c0_15] : memref<1x6xf32, #tpu.memory_space<vmem>>, vector<1x6xf32>
    %cst_16 = arith.constant dense<0.000000e+00> : vector<8x6xf32>
    %17 = tpu.matmul %14, %15, %cst_16 {dimension_numbers = #tpu.dot_dimension_numbers<[1], [0], [0], [1], [0, 0, 1, 1], [], []>} : vector<8x32xf32>, vector<32x6xf32>, vector<8x6xf32> -> vector<8x6xf32>
    %18 = vector.broadcast %16 : vector<1x6xf32> to vector<8x6xf32>
    %19 = arith.addf %17, %18 : vector<8x6xf32>
    %c0_17 = arith.constant 0 : index
    %c0_18 = arith.constant 0 : index
    %20 = vector.load %arg7[%c0_17, %c0_18] : memref<8x6xf32, #tpu.memory_space<vmem>>, vector<8x6xf32>
    tpu.vector_store %arg7[%c0_17, %c0_18], %19 {strides = array<i32>} : memref<8x6xf32, #tpu.memory_space<vmem>>, vector<8x6xf32>,
    return
  }
}

</mosaic_0001>

<llo_original>
// kernel: mlp_forward.1
$region0: #{mlp_forward.1}
  #allocation0 [shape = 'u32[]', space=smem, size = 0x4, offset = 0x4, fixed_abs, tag = 'smem constant byte address 0x4 - core index']
  #allocation1 [shape = 'u32[144,128]{1,0:T(1,128)}', space=vmem, size = 0x12000, scoped, tag = 'internal scratch']
  %s0 = inlined_call_operand.vmem [shape: f32[8,64], index: 0, kind: input, shape index: {}]
  %s1 = inlined_call_operand.vmem [shape: f32[64,32], index: 1, kind: input, shape index: {}]
  %s2 = inlined_call_operand.vmem [shape: f32[1,32], index: 2, kind: input, shape index: {}]
  %s3 = inlined_call_operand.vmem [shape: f32[32,32], index: 3, kind: input, shape index: {}]
  %s4 = inlined_call_operand.vmem [shape: f32[1,32], index: 4, kind: input, shape index: {}]
  %s5 = inlined_call_operand.vmem [shape: f32[32,6], index: 5, kind: input, shape index: {}]
  %s6 = inlined_call_operand.vmem [shape: f32[1,6], index: 6, kind: input, shape index: {}]
  %s7 = inlined_call_operand.hbm [shape: f32[8,6], index: 7, kind: output, shape index: {}]
  %s8 = sld [smem:[#allocation0]]
  $region38: #{mlp_forward.1} parent=0
    _
  %s10 = ssub.s32 1, %s8
  %s11 = scalar_select 0, %s10, %s8
  $region1: #{mlp_forward.1} parent=0
    #allocation2 [shape = 'u8[4096]{0}', space=vmem, size = 0x1000, scoped, tag = 'output window, operand 0, single buffered']
    #allocation3 [shape = 's32[1]{0}', space=sflag, size = 0x4, scoped, tag = 'scoped memory for mlp_forward.1']
    %12 = vsyncpa [#allocation3], 0
    // Predicated region
    $region2: #{mlp_forward.1} parent=1 // pred_check
      _
    $region3: #{mlp_forward.1} parent=1 // pred_check_branch
      %14 = sbr.rel (0) target = $region5
    $region4: #{mlp_forward.1} parent=1 // pred_region
      _
    $region5: #{mlp_forward.1} parent=1 // pred_fallthru
      _
    // Predicated region
    $region6: #{mlp_forward.1} parent=1 // pred_check
      _
    $region7: #{mlp_forward.1} parent=1 // pred_check_branch
      %16 = sbr.rel (0) target = $region9
    $region8: #{mlp_forward.1} parent=1 // pred_region
      _
    $region9: #{mlp_forward.1} parent=1 // pred_fallthru
      _
    // Predicated region
    $region10: #{mlp_forward.1} parent=1 // pred_check
      _
    $region11: #{mlp_forward.1} parent=1 // pred_check_branch
      %18 = sbr.rel (0) target = $region13
    $region12: #{mlp_forward.1} parent=1 // pred_region
      _
    $region13: #{mlp_forward.1} parent=1 // pred_fallthru
      _
    // Predicated region
    $region14: #{mlp_forward.1} parent=1 // pred_check
      _
    $region15: #{mlp_forward.1} parent=1 // pred_check_branch
      %20 = sbr.rel (0) target = $region17
    $region16: #{mlp_forward.1} parent=1 // pred_region
      _
    $region17: #{mlp_forward.1} parent=1 // pred_fallthru
      _
    // Predicated region
    $region18: #{mlp_forward.1} parent=1 // pred_check
      _
    $region19: #{mlp_forward.1} parent=1 // pred_check_branch
      %22 = sbr.rel (0) target = $region21
    $region20: #{mlp_forward.1} parent=1 // pred_region
      _
    $region21: #{mlp_forward.1} parent=1 // pred_fallthru
      _
    // Predicated region
    $region22: #{mlp_forward.1} parent=1 // pred_check
      _
    $region23: #{mlp_forward.1} parent=1 // pred_check_branch
      %24 = sbr.rel (0) target = $region25
    $region24: #{mlp_forward.1} parent=1 // pred_region
      _
    $region25: #{mlp_forward.1} parent=1 // pred_fallthru
      _
    // Predicated region
    $region26: #{mlp_forward.1} parent=1 // pred_check
      _
    $region27: #{mlp_forward.1} parent=1 // pred_check_branch
      %26 = sbr.rel (0) target = $region29
    $region28: #{mlp_forward.1} parent=1 // pred_region
      _
    $region29: #{mlp_forward.1} parent=1 // pred_fallthru
      _
    %v27 = vld [vmem:[%s0] sm:$0xff]
    %v28 = vld [vmem:[%s1] sm:$0xff]
    %v29 = vld [vmem:[%s1 + $0x8] sm:$0xff]
    %v30 = vld [vmem:[%s1 + $0x10] sm:$0xff]
    %v31 = vld [vmem:[%s1 + $0x18] sm:$0xff]
    %v32 = vld [vmem:[%s1 + $0x20] sm:$0xff]
    %v33 = vld [vmem:[%s1 + $0x28] sm:$0xff]
    %v34 = vld [vmem:[%s1 + $0x30] sm:$0xff]
    %v35 = vld [vmem:[%s1 + $0x38] sm:$0xff]
    %v36 = vld [vmem:[%s2] sm:$0x1]
    %v38 = vlaneseq
    %v39 = vshrl.u32 %v38, 7
    %v40 = vsub.s32 0, %v39
    %v41 = vrot.slane %v36, %v40
    %vm43 = vcmask 523264
    %v45 = vsel %vm43, %v27, 0
    %47 = vmatprep.subr.mxu0 0.0
    %48 = vmatpush1.msra.mxu0 0.0
    %49 = vmatprep.subr.mxu0 0.0
    %50 = vmatpush1.msra.mxu0 0.0
    %51 = vmatprep.subr.mxu0 0.0
    %52 = vmatpush1.msra.mxu0 0.0
    %53 = vmatprep.subr.mxu0 0.0
    %54 = vmatpush1.msra.mxu0 0.0
    %55 = vmatprep.subr.mxu0 0.0
    %56 = vmatpush1.msra.mxu0 0.0
    %57 = vmatprep.subr.mxu0 0.0
    %58 = vmatpush1.msra.mxu0 0.0
    %59 = vmatprep.subr.mxu0 0.0
    %60 = vmatpush1.msra.mxu0 0.0
    %61 = vmatprep.subr.mxu0 0.0
    %62 = vmatpush1.msra.mxu0 0.0
    %63 = vmatprep.subr.mxu0 0.0
    %64 = vmatpush1.msra.mxu0 %v35
    %65 = vmatprep.subr.mxu0 0.0
    %66 = vmatpush1.msra.mxu0 %v34
    %67 = vmatprep.subr.mxu0 0.0
    %68 = vmatpush1.msra.mxu0 %v33
    %69 = vmatprep.subr.mxu0 0.0
    %70 = vmatpush1.msra.mxu0 %v32
    %71 = vmatprep.subr.mxu0 0.0
    %72 = vmatpush1.msra.mxu0 %v31
    %73 = vmatprep.subr.mxu0 0.0
    %74 = vmatpush1.msra.mxu0 %v30
    %75 = vmatprep.subr.mxu0 0.0
    %76 = vmatpush1.msra.mxu0 %v29
    %77 = vmatprep.subr.mxu0 0.0
    %78 = vmatpush1.msra.mxu0 %v28
    %79 = vmatprep.subr.mxu0 0.0
    %80 = vmatpush2.msra.mxu0 0.0
    %81 = vmatprep.subr.mxu0 0.0
    %82 = vmatpush2.msra.mxu0 0.0
    %83 = vmatprep.subr.mxu0 0.0
    %84 = vmatpush2.msra.mxu0 0.0
    %85 = vmatprep.subr.mxu0 0.0
    %86 = vmatpush2.msra.mxu0 0.0
    %87 = vmatprep.subr.mxu0 0.0
    %88 = vmatpush2.msra.mxu0 0.0
    %89 = vmatprep.subr.mxu0 0.0
    %90 = vmatpush2.msra.mxu0 0.0
    %91 = vmatprep.subr.mxu0 0.0
    %92 = vmatpush2.msra.mxu0 0.0
    %93 = vmatprep.subr.mxu0 0.0
    %94 = vmatpush2.msra.mxu0 0.0
    %95 = vmatprep.subr.mxu0 0.0
    %96 = vmatpush2.msra.mxu0 0.0
    %97 = vmatprep.subr.mxu0 0.0
    %98 = vmatpush2.msra.mxu0 0.0
    %99 = vmatprep.subr.mxu0 0.0
    %100 = vmatpush2.msra.mxu0 0.0
    %101 = vmatprep.subr.mxu0 0.0
    %102 = vmatpush2.msra.mxu0 0.0
    %103 = vmatprep.subr.mxu0 0.0
    %104 = vmatpush2.msra.mxu0 0.0
    %105 = vmatprep.subr.mxu0 0.0
    %106 = vmatpush2.msra.mxu0 0.0
    %107 = vmatprep.subr.mxu0 0.0
    %108 = vmatpush2.msra.mxu0 0.0
    %109 = vmatprep.subr.mxu0 0.0
    %110 = vmatpush2.msra.mxu0 0.0
    %111 = vmatprep.mubr.f32.mxu0 0.0
    %112 = vmatmul.mubr.f32.gmra.mxu0 %v45
    %v113 = vpop.f32.mrf.mxu0
    %v114 = vadd.f32 %v41, %v113
    %v115 = vpop.f32.mrf.mxu0
    %116 = vdwg.mxu0
    %v117 = vmax.f32 %v114, 0.0
    %v118 = vld [vmem:[%s3] sm:$0xff]
    %v119 = vld [vmem:[%s3 + $0x8] sm:$0xff]
    %v120 = vld [vmem:[%s3 + $0x10] sm:$0xff]
    %v121 = vld [vmem:[%s3 + $0x18] sm:$0xff]
    %v122 = vld [vmem:[%s4] sm:$0x1]
    %v124 = vlaneseq
    %v125 = vshrl.u32 %v124, 7
    %v126 = vsub.s32 0, %v125
    %v127 = vrot.slane %v122, %v126
    %vm129 = vcmask 261120
    %v131 = vsel %vm129, %v117, 0
    %133 = vmatprep.subr.mxu0 0.0
    %134 = vmatpush1.msra.mxu0 0.0
    %135 = vmatprep.subr.mxu0 0.0
    %136 = vmatpush1.msra.mxu0 0.0
    %137 = vmatprep.subr.mxu0 0.0
    %138 = vmatpush1.msra.mxu0 0.0
    %139 = vmatprep.subr.mxu0 0.0
    %140 = vmatpush1.msra.mxu0 0.0
    %141 = vmatprep.subr.mxu0 0.0
    %142 = vmatpush1.msra.mxu0 0.0
    %143 = vmatprep.subr.mxu0 0.0
    %144 = vmatpush1.msra.mxu0 0.0
    %145 = vmatprep.subr.mxu0 0.0
    %146 = vmatpush1.msra.mxu0 0.0
    %147 = vmatprep.subr.mxu0 0.0
    %148 = vmatpush1.msra.mxu0 0.0
    %149 = vmatprep.subr.mxu0 0.0
    %150 = vmatpush1.msra.mxu0 0.0
    %151 = vmatprep.subr.mxu0 0.0
    %152 = vmatpush1.msra.mxu0 0.0
    %153 = vmatprep.subr.mxu0 0.0
    %154 = vmatpush1.msra.mxu0 0.0
    %155 = vmatprep.subr.mxu0 0.0
    %156 = vmatpush1.msra.mxu0 0.0
    %157 = vmatprep.subr.mxu0 0.0
    %158 = vmatpush1.msra.mxu0 %v121
    %159 = vmatprep.subr.mxu0 0.0
    %160 = vmatpush1.msra.mxu0 %v120
    %161 = vmatprep.subr.mxu0 0.0
    %162 = vmatpush1.msra.mxu0 %v119
    %163 = vmatprep.subr.mxu0 0.0
    %164 = vmatpush1.msra.mxu0 %v118
    %165 = vmatprep.subr.mxu0 0.0
    %166 = vmatpush2.msra.mxu0 0.0
    %167 = vmatprep.subr.mxu0 0.0
    %168 = vmatpush2.msra.mxu0 0.0
    %169 = vmatprep.subr.mxu0 0.0
    %170 = vmatpush2.msra.mxu0 0.0
    %171 = vmatprep.subr.mxu0 0.0
    %172 = vmatpush2.msra.mxu0 0.0
    %173 = vmatprep.subr.mxu0 0.0
    %174 = vmatpush2.msra.mxu0 0.0
    %175 = vmatprep.subr.mxu0 0.0
    %176 = vmatpush2.msra.mxu0 0.0
    %177 = vmatprep.subr.mxu0 0.0
    %178 = vmatpush2.msra.mxu0 0.0
    %179 = vmatprep.subr.mxu0 0.0
    %180 = vmatpush2.msra.mxu0 0.0
    %181 = vmatprep.subr.mxu0 0.0
    %182 = vmatpush2.msra.mxu0 0.0
    %183 = vmatprep.subr.mxu0 0.0
    %184 = vmatpush2.msra.mxu0 0.0
    %185 = vmatprep.subr.mxu0 0.0
    %186 = vmatpush2.msra.mxu0 0.0
    %187 = vmatprep.subr.mxu0 0.0
    %188 = vmatpush2.msra.mxu0 0.0
    %189 = vmatprep.subr.mxu0 0.0
    %190 = vmatpush2.msra.mxu0 0.0
    %191 = vmatprep.subr.mxu0 0.0
    %192 = vmatpush2.msra.mxu0 0.0
    %193 = vmatprep.subr.mxu0 0.0
    %194 = vmatpush2.msra.mxu0 0.0
    %195 = vmatprep.subr.mxu0 0.0
    %196 = vmatpush2.msra.mxu0 0.0
    %197 = vmatprep.mubr.f32.mxu0 0.0
    %198 = vmatmul.mubr.f32.gmra.mxu0 %v131
    %v199 = vpop.f32.mrf.mxu0
    %v200 = vadd.f32 %v127, %v199
    %v201 = vpop.f32.mrf.mxu0
    %202 = vdwg.mxu0
    %v203 = vmax.f32 %v200, 0.0
    %v204 = vld [vmem:[%s5] sm:$0xff]
    %v205 = vld [vmem:[%s5 + $0x8] sm:$0xff]
    %v206 = vld [vmem:[%s5 + $0x10] sm:$0xff]
    %v207 = vld [vmem:[%s5 + $0x18] sm:$0xff]
    %v208 = vld [vmem:[%s6] sm:$0x1]
    %v210 = vlaneseq
    %v211 = vshrl.u32 %v210, 7
    %v212 = vsub.s32 0, %v211
    %v213 = vrot.slane %v208, %v212
    %v216 = vsel %vm129, %v203, 0
    %218 = vmatprep.subr.mxu0 0.0
    %219 = vmatpush1.msra.mxu0 0.0
    %220 = vmatprep.subr.mxu0 0.0
    %221 = vmatpush1.msra.mxu0 0.0
    %222 = vmatprep.subr.mxu0 0.0
    %223 = vmatpush1.msra.mxu0 0.0
    %224 = vmatprep.subr.mxu0 0.0
    %225 = vmatpush1.msra.mxu0 0.0
    %226 = vmatprep.subr.mxu0 0.0
    %227 = vmatpush1.msra.mxu0 0.0
    %228 = vmatprep.subr.mxu0 0.0
    %229 = vmatpush1.msra.mxu0 0.0
    %230 = vmatprep.subr.mxu0 0.0
    %231 = vmatpush1.msra.mxu0 0.0
    %232 = vmatprep.subr.mxu0 0.0
    %233 = vmatpush1.msra.mxu0 0.0
    %234 = vmatprep.subr.mxu0 0.0
    %235 = vmatpush1.msra.mxu0 0.0
    %236 = vmatprep.subr.mxu0 0.0
    %237 = vmatpush1.msra.mxu0 0.0
    %238 = vmatprep.subr.mxu0 0.0
    %239 = vmatpush1.msra.mxu0 0.0
    %240 = vmatprep.subr.mxu0 0.0
    %241 = vmatpush1.msra.mxu0 0.0
    %242 = vmatprep.subr.mxu0 0.0
    %243 = vmatpush1.msra.mxu0 %v207
    %244 = vmatprep.subr.mxu0 0.0
    %245 = vmatpush1.msra.mxu0 %v206
    %246 = vmatprep.subr.mxu0 0.0
    %247 = vmatpush1.msra.mxu0 %v205
    %248 = vmatprep.subr.mxu0 0.0
    %249 = vmatpush1.msra.mxu0 %v204
    %250 = vmatprep.subr.mxu0 0.0
    %251 = vmatpush2.msra.mxu0 0.0
    %252 = vmatprep.subr.mxu0 0.0
    %253 = vmatpush2.msra.mxu0 0.0
    %254 = vmatprep.subr.mxu0 0.0
    %255 = vmatpush2.msra.mxu0 0.0
    %256 = vmatprep.subr.mxu0 0.0
    %257 = vmatpush2.msra.mxu0 0.0
    %258 = vmatprep.subr.mxu0 0.0
    %259 = vmatpush2.msra.mxu0 0.0
    %260 = vmatprep.subr.mxu0 0.0
    %261 = vmatpush2.msra.mxu0 0.0
    %262 = vmatprep.subr.mxu0 0.0
    %263 = vmatpush2.msra.mxu0 0.0
    %264 = vmatprep.subr.mxu0 0.0
    %265 = vmatpush2.msra.mxu0 0.0
    %266 = vmatprep.subr.mxu0 0.0
    %267 = vmatpush2.msra.mxu0 0.0
    %268 = vmatprep.subr.mxu0 0.0
    %269 = vmatpush2.msra.mxu0 0.0
    %270 = vmatprep.subr.mxu0 0.0
    %271 = vmatpush2.msra.mxu0 0.0
    %272 = vmatprep.subr.mxu0 0.0
    %273 = vmatpush2.msra.mxu0 0.0
    %274 = vmatprep.subr.mxu0 0.0
    %275 = vmatpush2.msra.mxu0 0.0
    %276 = vmatprep.subr.mxu0 0.0
    %277 = vmatpush2.msra.mxu0 0.0
    %278 = vmatprep.subr.mxu0 0.0
    %279 = vmatpush2.msra.mxu0 0.0
    %280 = vmatprep.subr.mxu0 0.0
    %281 = vmatpush2.msra.mxu0 0.0
    %282 = vmatprep.mubr.f32.mxu0 0.0
    %283 = vmatmul.mubr.f32.gmra.mxu0 %v216
    %v284 = vpop.f32.mrf.mxu0
    %v285 = vadd.f32 %v213, %v284
    %v286 = vpop.f32.mrf.mxu0
    %287 = vdwg.mxu0
    %vm288 = vcmask 48128
    %289 = vst.msk [vmem:[#allocation2] sm:$0xff] %vm288, %v285
    // Predicated region
    $region30: #{mlp_forward.1} parent=1 // pred_check
      _
    $region31: #{mlp_forward.1} parent=1 // pred_check_branch
      %291 = sbr.rel (0) target = $region33
    $region32: #{mlp_forward.1} parent=1 // pred_region
      %s293 = ssub.s32 128, 128
      %294 = vsyncadd [#allocation3], %s293
      %s296 = sshll.u32 [#allocation2], 4
      %s297 = int_to_ptr.vmem [resolvable:$true] %s296
      %299 = dma.vmem_to_hbm [thread:$0]  %s297, 128, %s7, [#allocation3]
    $region33: #{mlp_forward.1} parent=1 // pred_fallthru
      _
    // Predicated region
    $region34: #{mlp_forward.1} parent=1 // pred_check
      _
    $region35: #{mlp_forward.1} parent=1 // pred_check_branch
      %301 = sbr.rel (0) target = $region37
    $region36: #{mlp_forward.1} parent=1 // pred_region
      %302 = dma.done [#allocation3], 128
    $region37: #{mlp_forward.1} parent=1 // pred_fallthru
      _
    %303 = vsyncpa [#allocation3], 1

</llo_original>
